<compile_context>
chip_gen: v7x
topology: tpu7x:2x2x1
jax: 0.10.0
libtpu: 0.0.40
codegen_flags: <defaults>
</compile_context>

<pallas_src>
import functools

import jax
import jax.numpy as jnp
from jax.experimental import pallas as pl
from jax.experimental.pallas import tpu as pltpu


_EPS = 1e-5
_LANE = 128
_DEFAULT_CHUNK = 2048  # lane-chunk for the fused kernel's in-VMEM sweeps


def _round_up(x, m):
    return (x + m - 1) // m * m


def _vmem_capacity_bytes():
    """Per-TensorCore VMEM capacity; conservative fallback if query fails."""
    try:
        info = pltpu.get_tpu_info()
        cap = getattr(info, "vmem_capacity_bytes", None)
        if cap:
            return int(cap)
    except Exception:
        pass
    return 64 * 1024 * 1024  # v7x per-TC size: safe lower bound everywhere


def _vmem_limit(est, cap):
    """vmem_limit_bytes for a pallas_call sized from its block estimate."""
    lim = max(int(est) * 5 // 4 + (2 << 20), 32 << 20)
    return int(min(lim, int(cap * 0.9)))


# --------------------------------------------------------------------------- #
# Path 1: fused single kernel — whole (C, HW) sample resident per grid step.   #
# --------------------------------------------------------------------------- #
def _fused_kernel(x_ref, p_ref, o_ref, *, hw, chunk):
    # x_ref block: (1, C, HW); p_ref block: (C, 3) = [alpha | gamma | beta].
    c = x_ref.shape[1]
    inv_hw = 1.0 / float(hw)
    n_main = hw // chunk
    rem = hw - n_main * chunk  # static tail (< chunk)

    def _load(start, size):
        return x_ref[0, :, pl.ds(start, size)].astype(jnp.float32)

    # Pass 1: per-channel sum -> spatial mean mu (C, 1). Chunked so no full
    # (C, HW) f32 temporary is ever materialized in VMEM.
    s1 = jnp.zeros((c, 1), jnp.float32)
    if n_main > 0:
        def body1(i, acc):
            start = pl.multiple_of(i * chunk, _LANE)
            return acc + jnp.sum(_load(start, chunk), axis=1, keepdims=True)
        s1 = jax.lax.fori_loop(0, n_main, body1, s1)
    if rem > 0:
        s1 = s1 + jnp.sum(_load(n_main * chunk, rem), axis=1, keepdims=True)
    mu = s1 * inv_hw

    # Pass 2: centered sum of squares -> biased spatial variance (C, 1).
    s2 = jnp.zeros((c, 1), jnp.float32)
    if n_main > 0:
        def body2(i, acc):
            start = pl.multiple_of(i * chunk, _LANE)
            d = _load(start, chunk) - mu
            return acc + jnp.sum(d * d, axis=1, keepdims=True)
        s2 = jax.lax.fori_loop(0, n_main, body2, s2)
    if rem > 0:
        d = _load(n_main * chunk, rem) - mu
        s2 = s2 + jnp.sum(d * d, axis=1, keepdims=True)
    var = s2 * inv_hw

    # Cross-channel stats of the per-channel means (unbiased, like torch.var).
    # NOTE: C == 1 divides by (C - 1) == 0 -> NaN, matching PyTorch semantics.
    m = jnp.mean(mu, axis=0, keepdims=True)
    dm = mu - m
    v = jnp.sum(dm * dm, axis=0, keepdims=True) / (c - 1)
    means_n = dm * jax.lax.rsqrt(v + _EPS)

    p = p_ref[...]                                        # (C, 3) f32
    alpha = p[:, 0:1]
    gamma = p[:, 1:2]
    beta = p[:, 2:3]

    # Fold the whole affine chain into one per-channel scale/bias; apply is
    # exactly 2 VALU ops per element.
    scale = gamma * jax.lax.rsqrt(var + _EPS)             # (C, 1)
    bias = gamma * means_n * alpha + beta - scale * mu    # (C, 1)

    # Pass 3: apply, chunk-wise 128-aligned loads/stores.
    if n_main > 0:
        @pl.loop(0, n_main)
        def _(i):
            start = pl.multiple_of(i * chunk, _LANE)
            xc = _load(start, chunk)
            o_ref[0, :, pl.ds(start, chunk)] = (xc * scale + bias).astype(o_ref.dtype)
    if rem > 0:
        start = n_main * chunk
        xt = _load(start, rem)
        o_ref[0, :, pl.ds(start, rem)] = (xt * scale + bias).astype(o_ref.dtype)


def _run_fused(x3, params, hw, chunk, vmem_est, cap):
    n, c, _ = x3.shape
    kern = functools.partial(_fused_kernel, hw=hw, chunk=chunk)
    # TODO(synk): on multi-TensorCore parts (v7x) with N == 1, add an HW-chunk
    # parallel axis (or route to the tiled path) for megacore utilization.
    return pl.pallas_call(
        kern,
        out_shape=jax.ShapeDtypeStruct((n, c, hw), x3.dtype),
        grid=(n,),
        in_specs=[
            pl.BlockSpec((1, c, hw), lambda i: (i, 0, 0)),
            pl.BlockSpec((c, 3), lambda i: (0, 0)),   # params stay VMEM-resident
        ],
        out_specs=pl.BlockSpec((1, c, hw), lambda i: (i, 0, 0)),
        compiler_params=pltpu.CompilerParams(
            dimension_semantics=("parallel",),
            vmem_limit_bytes=_vmem_limit(vmem_est, cap),
        ),
    )(x3, params)


# --------------------------------------------------------------------------- #
# Path 2: two-pass HW-tiled path for large C*HW samples (VMEM budget guard).   #
# --------------------------------------------------------------------------- #
def _stats_kernel(x_ref, s_ref, *, hw, tile):
    # Per-tile partial [sum, sum_sq]; tail tile is masked in-kernel (no host
    # padding). Each grid step owns its own output block -> fully parallel.
    j = pl.program_id(1)
    x = x_ref[0].astype(jnp.float32)                      # (C, tile)
    valid = hw - j * tile
    mask = jax.lax.broadcasted_iota(jnp.int32, x.shape, 1) < valid
    x = jnp.where(mask, x, 0.0)
    s1 = jnp.sum(x, axis=1, keepdims=True)                # (C, 1)
    s2 = jnp.sum(x * x, axis=1, keepdims=True)            # (C, 1)
    s_ref[0, 0] = jnp.concatenate([s1, s2], axis=1)       # (C, 2)


def _apply_kernel(x_ref, sb_ref, o_ref):
    x = x_ref[0].astype(jnp.float32)                      # (C, T)
    sb = sb_ref[0]                                        # (C, 2) = [scale|bias]
    # Tail tile: out-of-bounds lanes hold stale data but Pallas clips the
    # partial output block on writeback, so garbage is never stored to HBM.
    o_ref[0] = (x * sb[:, 0:1] + sb[:, 1:2]).astype(o_ref.dtype)


def _pick_tile(budget, c, bytes_per_elem, hw):
    t = (budget // max(c * bytes_per_elem, 1)) // _LANE * _LANE
    t = max(512, t)                        # >= 512 lanes (DMA efficiency)
    return min(t, _round_up(hw, _LANE))    # never wider than one sample row


def _run_tiled(x3, alpha, gamma, beta, hw, hw_tile, budget, cap):
    n, c, _ = x3.shape
    itemsize = x3.dtype.itemsize

    if hw_tile is not None:
        t_stats = t_apply = min(_round_up(int(hw_tile), _LANE), _round_up(hw, _LANE))
    else:
        # Stats pass only double-buffers the input (+ f32 temps); apply pass
        # double-buffers input and output -> size the tiles separately.
        t_stats = _pick_tile(budget, c, 2 * itemsize + 12, hw)
        t_apply = _pick_tile(budget, c, 4 * itemsize + 8, hw)

    n_stats = pl.cdiv(hw, t_stats)
    stats_est = c * t_stats * (2 * itemsize + 12) + (1 << 20)
    stats = pl.pallas_call(
        functools.partial(_stats_kernel, hw=hw, tile=t_stats),
        out_shape=jax.ShapeDtypeStruct((n, n_stats, c, 2), jnp.float32),
        grid=(n, n_stats),
        in_specs=[pl.BlockSpec((1, c, t_stats), lambda i, j: (i, 0, j))],
        out_specs=pl.BlockSpec((1, 1, c, 2), lambda i, j: (i, j, 0, 0)),
        compiler_params=pltpu.CompilerParams(
            dimension_semantics=("parallel", "parallel"),
            vmem_limit_bytes=_vmem_limit(stats_est, cap),
        ),
    )(x3)

    # Tiny (N, C) epilogue in plain JAX: fold everything into scale/bias.
    s = jnp.sum(stats, axis=1)                                   # (N, C, 2)
    s1 = s[..., 0]
    s2 = s[..., 1]
    inv_hw = 1.0 / float(hw)
    mu = s1 * inv_hw
    var = jnp.maximum(s2 * inv_hw - mu * mu, 0.0)                # biased spatial var
    m = jnp.mean(mu, axis=1, keepdims=True)
    v = jnp.sum((mu - m) ** 2, axis=1, keepdims=True) / (c - 1)  # NaN if C == 1 (PyTorch)
    means_n = (mu - m) * jax.lax.rsqrt(v + _EPS)
    scale = gamma[None, :] * jax.lax.rsqrt(var + _EPS)
    bias = gamma[None, :] * means_n * alpha[None, :] + beta[None, :] - scale * mu
    sb = jnp.stack([scale, bias], axis=-1).astype(jnp.float32)   # (N, C, 2)

    n_apply = pl.cdiv(hw, t_apply)
    apply_est = c * t_apply * (4 * itemsize + 8) + (1 << 20)
    return pl.pallas_call(
        _apply_kernel,
        out_shape=jax.ShapeDtypeStruct(x3.shape, x3.dtype),
        grid=(n, n_apply),
        in_specs=[
            pl.BlockSpec((1, c, t_apply), lambda i, j: (i, 0, j)),
            pl.BlockSpec((1, c, 2), lambda i, j: (i, 0, 0)),
        ],
        out_specs=pl.BlockSpec((1, c, t_apply), lambda i, j: (i, 0, j)),
        compiler_params=pltpu.CompilerParams(
            dimension_semantics=("parallel", "parallel"),
            vmem_limit_bytes=_vmem_limit(apply_est, cap),
        ),
    )(x3, sb)


# --------------------------------------------------------------------------- #
# Wrapper                                                                      #
# --------------------------------------------------------------------------- #
def instance_norm_2d_plus(x, alpha, gamma, beta, *, hw_tile=None, chunk=_DEFAULT_CHUNK):
    """InstanceNorm2dPlus forward. x: (N, C, H, W); alpha/gamma/beta: (C,)."""
    n, c, h, w = x.shape
    hw = h * w
    itemsize = x.dtype.itemsize
    chunk = max(_LANE, _round_up(int(chunk), _LANE))

    cap = _vmem_capacity_bytes()
    budget = int(cap * 0.70)  # ~90 MiB on 128 MiB parts, ~45 MiB on v7x (64 MiB/TC)

    # Free reshape (merges trailing dims); no padding or slicing copies.
    x3 = x.reshape(n, c, hw)

    # Fused-path footprint: double-buffered in + out blocks plus chunk-sized
    # f32 temporaries (chunked sweeps keep temps at O(C * chunk), not C * HW).
    fused_est = 4 * c * hw * itemsize + 24 * c * min(hw, chunk) + (1 << 20)
    use_tiled = (hw_tile is not None) or (fused_est > budget)

    if use_tiled:
        out3 = _run_tiled(x3,
                          alpha.astype(jnp.float32),
                          gamma.astype(jnp.float32),
                          beta.astype(jnp.float32),
                          hw, hw_tile, budget, cap)
    else:
        params = jnp.stack([alpha, gamma, beta], axis=1).astype(jnp.float32)  # (C, 3)
        out3 = _run_fused(x3, params, hw, chunk, fused_est, cap)

    return out3.reshape(n, c, h, w)


def _reference(x, alpha, gamma, beta):
    # Pure-JAX reference mirroring the PyTorch forward exactly.
    means = jnp.mean(x, axis=(2, 3))                             # (N, C)
    m = jnp.mean(means, axis=-1, keepdims=True)                  # (N, 1)
    v = jnp.var(means, axis=-1, keepdims=True, ddof=1)           # unbiased
    means = (means - m) / jnp.sqrt(v + _EPS)                     # (N, C)
    mu = jnp.mean(x, axis=(2, 3), keepdims=True)
    var = jnp.var(x, axis=(2, 3), keepdims=True)                 # biased
    h = (x - mu) / jnp.sqrt(var + _EPS)
    h = h + means[..., None, None] * alpha[None, :, None, None]
    return gamma[None, :, None, None] * h + beta[None, :, None, None]


if __name__ == "__main__":
    key = jax.random.PRNGKey(0)
    kx, ka, kg = jax.random.split(key, 3)

    N, C, H, W = 2, 4, 16, 16
    x = jax.random.normal(kx, (N, C, H, W), dtype=jnp.float32)

    # Parameter init matching the module: alpha, gamma ~ N(1, 0.02), beta = 0.
    alpha = 1.0 + 0.02 * jax.random.normal(ka, (C,), dtype=jnp.float32)
    gamma = 1.0 + 0.02 * jax.random.normal(kg, (C,), dtype=jnp.float32)
    beta = jnp.zeros((C,), dtype=jnp.float32)

    ref = _reference(x, alpha, gamma, beta)

    # Fused single-pass path (default for small samples).
    out = jax.block_until_ready(instance_norm_2d_plus(x, alpha, gamma, beta))
    assert out.shape == (N, C, H, W)
    assert jnp.allclose(out, ref, atol=1e-4, rtol=1e-4), "fused path mismatch"

    # Force the two-pass HW-tiled path (used automatically for big C*H*W).
    out_t = jax.block_until_ready(
        instance_norm_2d_plus(x, alpha, gamma, beta, hw_tile=128))
    assert jnp.allclose(out_t, ref, atol=1e-4, rtol=1e-4), "tiled path mismatch"

    # Non-multiple-of-128 spatial size: no host-side pad; fused path uses a
    # full-extent block, tiled path masks the tail tile in-kernel.
    x2 = jax.random.normal(jax.random.PRNGKey(1), (N, C, 14, 14), dtype=jnp.float32)
    ref2 = _reference(x2, alpha, gamma, beta)
    out2 = jax.block_until_ready(instance_norm_2d_plus(x2, alpha, gamma, beta))
    assert jnp.allclose(out2, ref2, atol=1e-4, rtol=1e-4), "unpadded fused mismatch"
    out2t = jax.block_until_ready(
        instance_norm_2d_plus(x2, alpha, gamma, beta, hw_tile=128))
    assert jnp.allclose(out2t, ref2, atol=1e-4, rtol=1e-4), "masked tiled mismatch"

    # Exercise the chunked fused sweeps (HW > chunk) at a modest size.
    x3 = jax.random.normal(jax.random.PRNGKey(2), (1, C, 48, 48), dtype=jnp.float32)
    ref3 = _reference(x3, alpha, gamma, beta)
    out3 = jax.block_until_ready(
        instance_norm_2d_plus(x3, alpha, gamma, beta, chunk=1024))
    assert jnp.allclose(out3, ref3, atol=1e-4, rtol=1e-4), "chunked fused mismatch"

    print("KERNEL_OK")
</pallas_src>

<mosaic_0001>
module attributes {stable_mosaic.version = 11 : i64} {
  func.func @_fused_kernel(%arg0: i32, %arg1: memref<1x4x256xf32, #tpu.memory_space<vmem>>, %arg2: memref<4x3xf32, #tpu.memory_space<vmem>>, %arg3: memref<1x4x256xf32, #tpu.memory_space<vmem>>) attributes {dimension_semantics = [#tpu.dimension_semantics<parallel>], iteration_bounds = array<i64: 2>, scalar_prefetch = 0 : i64, scratch_operands = 0 : i64, tpu.core_type = #tpu.core_type<tc>, window_params = [{transform_indices = @transform_0, window_bounds = array<i64: 1, 4, 256>}, {pipeline_mode = #tpu.pipeline_mode<synchronous>, transform_indices = @transform_1, window_bounds = array<i64: 4, 3>}, {transform_indices = @transform_2, window_bounds = array<i64: 1, 4, 256>}]} {
    %cst = arith.constant 0.000000e+00 : f32
    %0 = vector.broadcast %cst : f32 to vector<4x1xf32>
    %c0 = arith.constant 0 : index
    %c0_0 = arith.constant 0 : index
    %c0_1 = arith.constant 0 : index
    %1 = vector.load %arg1[%c0, %c0_0, %c0_1] : memref<1x4x256xf32, #tpu.memory_space<vmem>>, vector<1x4x256xf32>
    %2 = vector.shape_cast %1 : vector<1x4x256xf32> to vector<4x256xf32>
    %cst_2 = arith.constant dense<0.000000e+00> : vector<4xf32>
    %3 = vector.multi_reduction <add>, %2, %cst_2 [1] : vector<4x256xf32> to vector<4xf32>
    %4 = vector.shape_cast %3 : vector<4xf32> to vector<4x1xf32>
    %5 = arith.addf %0, %4 : vector<4x1xf32>
    %cst_3 = arith.constant 3.906250e-03 : f32
    %6 = vector.broadcast %cst_3 : f32 to vector<4x1xf32>
    %7 = arith.mulf %5, %6 : vector<4x1xf32>
    %cst_4 = arith.constant 0.000000e+00 : f32
    %8 = vector.broadcast %cst_4 : f32 to vector<4x1xf32>
    %c0_5 = arith.constant 0 : index
    %c0_6 = arith.constant 0 : index
    %c0_7 = arith.constant 0 : index
    %9 = vector.load %arg1[%c0_5, %c0_6, %c0_7] : memref<1x4x256xf32, #tpu.memory_space<vmem>>, vector<1x4x256xf32>
    %10 = vector.shape_cast %9 : vector<1x4x256xf32> to vector<4x256xf32>
    %11 = vector.broadcast %7 : vector<4x1xf32> to vector<4x256xf32>
    %12 = arith.subf %10, %11 : vector<4x256xf32>
    %13 = arith.mulf %12, %12 : vector<4x256xf32>
    %cst_8 = arith.constant dense<0.000000e+00> : vector<4xf32>
    %14 = vector.multi_reduction <add>, %13, %cst_8 [1] : vector<4x256xf32> to vector<4xf32>
    %15 = vector.shape_cast %14 : vector<4xf32> to vector<4x1xf32>
    %16 = arith.addf %8, %15 : vector<4x1xf32>
    %cst_9 = arith.constant 3.906250e-03 : f32
    %17 = vector.broadcast %cst_9 : f32 to vector<4x1xf32>
    %18 = arith.mulf %16, %17 : vector<4x1xf32>
    %cst_10 = arith.constant dense<0.000000e+00> : vector<1xf32>
    %19 = vector.multi_reduction <add>, %7, %cst_10 [0] : vector<4x1xf32> to vector<1xf32>
    %20 = vector.shape_cast %19 : vector<1xf32> to vector<1x1xf32>
    %cst_11 = arith.constant 4.000000e+00 : f32
    %21 = vector.broadcast %cst_11 : f32 to vector<1x1xf32>
    %22 = arith.divf %20, %21 : vector<1x1xf32>
    %23 = vector.broadcast %22 : vector<1x1xf32> to vector<4x1xf32>
    %24 = arith.subf %7, %23 : vector<4x1xf32>
    %25 = arith.mulf %24, %24 : vector<4x1xf32>
    %cst_12 = arith.constant dense<0.000000e+00> : vector<1xf32>
    %26 = vector.multi_reduction <add>, %25, %cst_12 [0] : vector<4x1xf32> to vector<1xf32>
    %27 = vector.shape_cast %26 : vector<1xf32> to vector<1x1xf32>
    %cst_13 = arith.constant 3.000000e+00 : f32
    %28 = vector.broadcast %cst_13 : f32 to vector<1x1xf32>
    %29 = arith.divf %27, %28 : vector<1x1xf32>
    %cst_14 = arith.constant 9.99999974E-6 : f32
    %30 = vector.broadcast %cst_14 : f32 to vector<1x1xf32>
    %31 = arith.addf %29, %30 : vector<1x1xf32>
    %32 = math.rsqrt %31 : vector<1x1xf32>
    %33 = vector.broadcast %32 : vector<1x1xf32> to vector<4x1xf32>
    %34 = arith.mulf %24, %33 : vector<4x1xf32>
    %c0_15 = arith.constant 0 : index
    %c0_16 = arith.constant 0 : index
    %35 = vector.load %arg2[%c0_15, %c0_16] : memref<4x3xf32, #tpu.memory_space<vmem>>, vector<4x3xf32>
    %36 = vector.extract_strided_slice %35 {offsets = [0, 0], sizes = [4, 1], strides = [1, 1]} : vector<4x3xf32> to vector<4x1xf32>
    %37 = vector.extract_strided_slice %35 {offsets = [0, 1], sizes = [4, 1], strides = [1, 1]} : vector<4x3xf32> to vector<4x1xf32>
    %38 = vector.extract_strided_slice %35 {offsets = [0, 2], sizes = [4, 1], strides = [1, 1]} : vector<4x3xf32> to vector<4x1xf32>
    %cst_17 = arith.constant 9.99999974E-6 : f32
    %39 = vector.broadcast %cst_17 : f32 to vector<4x1xf32>
    %40 = arith.addf %18, %39 : vector<4x1xf32>
    %41 = math.rsqrt %40 : vector<4x1xf32>
    %42 = arith.mulf %37, %41 : vector<4x1xf32>
    %43 = arith.mulf %37, %34 : vector<4x1xf32>
    %44 = arith.mulf %43, %36 : vector<4x1xf32>
    %45 = arith.addf %44, %38 : vector<4x1xf32>
    %46 = arith.mulf %42, %7 : vector<4x1xf32>
    %47 = arith.subf %45, %46 : vector<4x1xf32>
    %c0_18 = arith.constant 0 : index
    %c0_19 = arith.constant 0 : index
    %c0_20 = arith.constant 0 : index
    %48 = vector.load %arg1[%c0_18, %c0_19, %c0_20] : memref<1x4x256xf32, #tpu.memory_space<vmem>>, vector<1x4x256xf32>
    %49 = vector.shape_cast %48 : vector<1x4x256xf32> to vector<4x256xf32>
    %50 = vector.broadcast %42 : vector<4x1xf32> to vector<4x256xf32>
    %51 = arith.mulf %49, %50 : vector<4x256xf32>
    %52 = vector.broadcast %47 : vector<4x1xf32> to vector<4x256xf32>
    %53 = arith.addf %51, %52 : vector<4x256xf32>
    %c0_21 = arith.constant 0 : index
    %c0_22 = arith.constant 0 : index
    %c0_23 = arith.constant 0 : index
    %54 = vector.load %arg3[%c0_21, %c0_22, %c0_23] : memref<1x4x256xf32, #tpu.memory_space<vmem>>, vector<1x4x256xf32>
    %55 = vector.shape_cast %54 : vector<1x4x256xf32> to vector<4x256xf32>
    %56 = vector.shape_cast %53 : vector<4x256xf32> to vector<1x4x256xf32>
    tpu.vector_store %arg3[%c0_21, %c0_22, %c0_23], %56 {strides = array<i32>} : memref<1x4x256xf32, #tpu.memory_space<vmem>>, vector<1x4x256xf32>,
    return
  }
  func.func @transform_0(%arg0: i32) -> (i32, i32, i32) {
    %c0_i32 = arith.constant 0 : i32
    %c0_i32_0 = arith.constant 0 : i32
    %c0_i32_1 = arith.constant 0 : i32
    return %arg0, %c0_i32, %c0_i32_0 : i32, i32, i32
  }
  func.func @transform_1(%arg0: i32) -> (i32, i32) {
    %c0_i32 = arith.constant 0 : i32
    %c0_i32_0 = arith.constant 0 : i32
    %c0_i32_1 = arith.constant 0 : i32
    return %c0_i32, %c0_i32_0 : i32, i32
  }
  func.func @transform_2(%arg0: i32) -> (i32, i32, i32) {
    %c0_i32 = arith.constant 0 : i32
    %c0_i32_0 = arith.constant 0 : i32
    %c0_i32_1 = arith.constant 0 : i32
    return %arg0, %c0_i32, %c0_i32_0 : i32, i32, i32
  }
}

</mosaic_0001>

<llo_original>
// kernel: tpu_custom_call.1
$region0: #{tpu_custom_call.1}
  #allocation0 [shape = 'u32[]', space=smem, size = 0x4, offset = 0x4, fixed_abs, tag = 'smem constant byte address 0x4 - core index']
  #allocation1 [shape = 'u32[144,128]{1,0:T(1,128)}', space=vmem, size = 0x12000, scoped, tag = 'internal scratch']
  %s0 = inlined_call_operand.hbm [shape: f32[2,4,256], index: 0, kind: input, shape index: {}]
  %s1 = inlined_call_operand.hbm [shape: f32[4,3], index: 1, kind: input, shape index: {}]
  %s2 = inlined_call_operand.hbm [shape: f32[2,4,256], index: 2, kind: output, shape index: {}]
  %s3 = sld [smem:[#allocation0]]
  $region49: #{tpu_custom_call.1} parent=0
    _
  %s5 = ssub.s32 1, %s3
  %s6 = scalar_select 0, %s5, %s3
  $region1: #{tpu_custom_call.1} parent=0
    #allocation2 [shape = 'u8[8192]{0}', space=vmem, size = 0x2000, scoped, tag = 'input window, operand 0']
    #allocation3 [shape = 's32[2]{0}', space=sflag, size = 0x8, scoped, tag = 'scoped memory for tpu_custom_call.1']
    #allocation4 [shape = 's32[2]{0}', space=sflag, size = 0x8, scoped, tag = 'scoped memory for tpu_custom_call.1']
    #allocation5 [shape = 'u8[2048]{0}', space=vmem, size = 0x800, scoped, tag = 'input window, operand 1, single buffered']
    #allocation6 [shape = 's32[1]{0}', space=sflag, size = 0x4, scoped, tag = 'scoped memory for tpu_custom_call.1']
    #allocation7 [shape = 'u8[8192]{0}', space=vmem, size = 0x2000, scoped, tag = 'output window, operand 0']
    %7 = vsyncpa [#allocation3], 0
    %s8 = scalar_lea.sflag [#allocation3], 1
    %9 = vsyncpa %s8, 0
    %10 = vsyncpa [#allocation6], 0
    %11 = vsyncpa [#allocation4], 0
    %s12 = scalar_lea.sflag [#allocation4], 1
    %13 = vsyncpa %s12, 0
    loop: start=0, step=1, limit=4
    $region2: #{tpu_custom_call.1} parent=1 // loop_pre_header
      _
    $region3: #{tpu_custom_call.1} parent=1 // loop_header
      %s15 = sphi 0, %s19
      %p16 = scmp.ge.s32.totalorder %s15, 4
      %s25 = sphi 0, %s27
      %s28 = sphi 0, %s25
      %s29 = sphi 0, %s28
      %s45 = sphi 0, %s29
      %s49 = sphi 0, %s49
      %s51 = sphi 0, %s49
      %s52 = sphi 0, %s51
      %s66 = sphi 0, %s52
      %s72 = sphi 0, %s74
      %s75 = sphi 0, %s72
      %s76 = sphi 0, %s75
      %s92 = sphi 0, %s76
    $region4: #{tpu_custom_call.1} parent=1 // loop_header_branch
      %18 = sbr.rel (%p16) target = $region8
    $region5: #{tpu_custom_call.1} parent=1 // loop_body
      %s20 = ssub.s32 %s15, 1
      %s21 = ssub.s32 %s15, 2
      %s22 = sadd.s32 %s15, 1
      %s23 = ssub.s32 %s15, %s22
      %p24 = scmp.eq.s32.totalorder %s23, 0
      %s26 = sadd.s32 %s25, 1
      %s27 = scalar_select %p24, %s25, %s26
      %p30 = pneg %p24
      %p31 = scmp.eq.s32.totalorder %s15, 1
      %p32 = por %p30, %p31
      %p33 = scmp.ne.s32.totalorder %s25, %s28
      %p34 = scmp.eq.s32.totalorder %s15, 0
      %p35 = por %p33, %p34
      %p36 = scmp.ne.s32.totalorder %s25, %s28
      %p37 = scmp.eq.s32.totalorder %s20, 1
      %p38 = por %p36, %p37
      %p39 = scmp.ne.s32.totalorder %s28, %s29
      %p40 = scmp.eq.s32.totalorder %s20, 0
      %p41 = por %p39, %p40
      %p42 = scmp.ne.s32.totalorder %s28, %s29
      %p43 = scmp.eq.s32.totalorder %s21, 1
      %p44 = por %p42, %p43
      %p46 = scmp.ne.s32.totalorder %s29, %s45
      %p47 = scmp.eq.s32.totalorder %s21, 0
      %p48 = por %p46, %p47
      %s50 = sadd.s32 %s49, 1
      %p53 = scmp.eq.s32.totalorder %s15, 1
      %p54 = scmp.ne.s32.totalorder %s49, %s51
      %p55 = scmp.eq.s32.totalorder %s15, 0
      %p56 = por %p54, %p55
      %p57 = scmp.ne.s32.totalorder %s49, %s51
      %p58 = scmp.eq.s32.totalorder %s20, 1
      %p59 = por %p57, %p58
      %p60 = scmp.ne.s32.totalorder %s51, %s52
      %p61 = scmp.eq.s32.totalorder %s20, 0
      %p62 = por %p60, %p61
      %p63 = scmp.ne.s32.totalorder %s51, %s52
      %p64 = scmp.eq.s32.totalorder %s21, 1
      %p65 = por %p63, %p64
      %p67 = scmp.ne.s32.totalorder %s52, %s66
      %p68 = scmp.eq.s32.totalorder %s21, 0
      %p69 = por %p67, %p68
      %s70 = ssub.s32 %s15, %s22
      %p71 = scmp.eq.s32.totalorder %s70, 0
      %s73 = sadd.s32 %s72, 1
      %s74 = scalar_select %p71, %s72, %s73
      %p77 = pneg %p71
      %p78 = scmp.eq.s32.totalorder %s15, 1
      %p79 = por %p77, %p78
      %p80 = scmp.ne.s32.totalorder %s72, %s75
      %p81 = scmp.eq.s32.totalorder %s15, 0
      %p82 = por %p80, %p81
      %p83 = scmp.ne.s32.totalorder %s72, %s75
      %p84 = scmp.eq.s32.totalorder %s20, 1
      %p85 = por %p83, %p84
      %p86 = scmp.ne.s32.totalorder %s75, %s76
      %p87 = scmp.eq.s32.totalorder %s20, 0
      %p88 = por %p86, %p87
      %p89 = scmp.ne.s32.totalorder %s75, %s76
      %p90 = scmp.eq.s32.totalorder %s21, 1
      %p91 = por %p89, %p90
      %p93 = scmp.ne.s32.totalorder %s76, %s92
      %p94 = scmp.eq.s32.totalorder %s21, 0
      %p95 = por %p93, %p94
      %p96 = scmp.le.s32.totalorder 1, %s15
      %p97 = scmp.lt.s32.totalorder %s15, 3
      %p98 = pnand %p96, %p97
      %p99 = pneg %p98
      // Predicated region
      $region9: #{tpu_custom_call.1} parent=5 // pred_check
        _
      $region10: #{tpu_custom_call.1} parent=5 // pred_check_branch
        %101 = sbr.rel (%p98) target = $region12
      $region11: #{tpu_custom_call.1} parent=5 // pred_region
        %s102 = ssub.s32 %s15, 1
        // Predicated region
        $region13: #{tpu_custom_call.1} parent=11 // pred_check
          %p103 = pneg %p62
        $region14: #{tpu_custom_call.1} parent=11 // pred_check_branch
          %105 = sbr.rel (%p103) target = $region16
        $region15: #{tpu_custom_call.1} parent=11 // pred_region
          %s107 = ssub.s32 64, 64
          %108 = vsyncadd [#allocation6], %s107
          %s110 = sshll.u32 [#allocation5], 4
          %s111 = int_to_ptr.vmem [resolvable:$true] %s110
          %113 = dma.hbm_to_vmem [thread:$0]  %s1, 64, %s111, [#allocation6]
        $region16: #{tpu_custom_call.1} parent=11 // pred_fallthru
          _
      $region12: #{tpu_custom_call.1} parent=5 // pred_fallthru
        _
      %p114 = scmp.lt.s32.totalorder %s15, 2
      // Predicated region
      $region17: #{tpu_custom_call.1} parent=5 // pred_check
        %p115 = pneg %p114
      $region18: #{tpu_custom_call.1} parent=5 // pred_check_branch
        %117 = sbr.rel (%p115) target = $region20
      $region19: #{tpu_custom_call.1} parent=5 // pred_region
        // Predicated region
        $region21: #{tpu_custom_call.1} parent=19 // pred_check
          %p118 = pneg %p35
        $region22: #{tpu_custom_call.1} parent=19 // pred_check_branch
          %120 = sbr.rel (%p118) target = $region24
        $region23: #{tpu_custom_call.1} parent=19 // pred_region
          %s121 = sand.u32 %s25, 1
          %s122 = scalar_lea.sflag [#allocation3], %s121
          %s123 = sand.u32 %s25, 1
          %s124 = smul.addr %s123, 8
          %s125 = scalar_lea.vmem [#allocation2], %s124
          %s127 = ssub.s32 128, 128
          %128 = vsyncadd %s122, %s127
          %s129 = smul.addr %s15, 2
          %s130 = smul.addr %s129, 64
          %s131 = scalar_lea.hbm %s0, %s130
          %s133 = sshll.u32 %s125, 4
          %s134 = int_to_ptr.vmem [resolvable:$true] %s133
          %136 = dma.hbm_to_vmem [thread:$0]  %s131, 128, %s134, %s122
        $region24: #{tpu_custom_call.1} parent=19 // pred_fallthru
          _
      $region20: #{tpu_custom_call.1} parent=5 // pred_fallthru
        _
      %p137 = scmp.le.s32.totalorder 1, %s15
      %p138 = scmp.lt.s32.totalorder %s15, 3
      %p139 = pnand %p137, %p138
      %p140 = pneg %p139
      // Predicated region
      $region25: #{tpu_custom_call.1} parent=5 // pred_check
        _
      $region26: #{tpu_custom_call.1} parent=5 // pred_check_branch
        %142 = sbr.rel (%p139) target = $region28
      $region27: #{tpu_custom_call.1} parent=5 // pred_region
        %s143 = ssub.s32 %s15, 1
        %s144 = sand.u32 %s28, 1
        %s145 = scalar_lea.sflag [#allocation3], %s144
        %s146 = sand.u32 %s28, 1
        %s147 = smul.addr %s146, 8
        %s148 = scalar_lea.vmem [#allocation2], %s147
        // Predicated region
        $region29: #{tpu_custom_call.1} parent=27 // pred_check
          %p149 = pneg %p41
        $region30: #{tpu_custom_call.1} parent=27 // pred_check_branch
          %151 = sbr.rel (%p149) target = $region32
        $region31: #{tpu_custom_call.1} parent=27 // pred_region
          %152 = dma.done %s145, 128
        $region32: #{tpu_custom_call.1} parent=27 // pred_fallthru
          _
        // Predicated region
        $region33: #{tpu_custom_call.1} parent=27 // pred_check
          %p153 = pneg %p62
        $region34: #{tpu_custom_call.1} parent=27 // pred_check_branch
          %155 = sbr.rel (%p153) target = $region36
        $region35: #{tpu_custom_call.1} parent=27 // pred_region
          %156 = dma.done [#allocation6], 64
        $region36: #{tpu_custom_call.1} parent=27 // pred_fallthru
          _
        %s157 = sand.u32 %s28, 1
        %s158 = scalar_lea.sflag [#allocation3], %s157
        %s159 = sand.u32 %s28, 1
        %s160 = smul.addr %s159, 8
        %s161 = scalar_lea.vmem [#allocation2], %s160
        %p162 = pneg %p41
        %p163 = pneg %p38
        %p164 = pneg %p62
        %p165 = pneg %p59
        %p166 = pneg %p88
        %p167 = pneg %p85
        %s168 = sand.u32 %s75, 1
        %s169 = scalar_lea.sflag [#allocation4], %s168
        %s170 = sand.u32 %s75, 1
        %s171 = smul.addr %s170, 8
        %s172 = scalar_lea.vmem [#allocation7], %s171
        %v173 = vld [vmem:[%s148] sm:$0xff]
        %v175 = vcombine.high %v173, %v173
        %vm177 = vcmask 1043456
        %v178 = vsel %vm177, %v173, 0.0
        %v179 = vsel %vm177, %v175, 0.0
        %v180 = vadd.f32 %v178, %v179
        %181 = vadd.xlane.f32.xlu0 %v180
        %v182 = vpop.xlane.xlu0 %181
        %v183 = vadd.f32 %v182, 0.0
        %v184 = vmul.f32 %v183, 0.00390625
        %v187 = vunpack.c.l.s4 839922192
        %v188 = vunpack.c.0.s8 %v187
        %v189 = vlaneseq
        %v190 = vshrl.u32 %v189, 7
        %v191 = vsub.s32 %v188, %v190
        %v192 = vrot.slane %v184, %v191
        %v194 = vsub.f32 %v173, %v192
        %v195 = vmul.f32 %v194, %v194
        %v197 = vcombine.high %v195, %v195
        %v199 = vsel %vm177, %v195, 0.0
        %v200 = vsel %vm177, %v197, 0.0
        %v201 = vadd.f32 %v199, %v200
        %202 = vadd.xlane.f32.xlu0 %v201
        %v203 = vpop.xlane.xlu0 %202
        %v204 = vadd.f32 %v203, 0.0
        %v205 = vmul.f32 %v204, 0.00390625
        %v206 = vsel %vm177, %v184, 0.0
        %v207 = vrot.slane %v206, 4
        %v208 = vadd.f32 %v206, %v207
        %v209 = vrot.slane %v208, 2
        %v210 = vadd.f32 %v208, %v209
        %v211 = vrot.slane %v210, 1
        %v212 = vadd.f32 %v210, %v211
        %v213 = vrcp.pop 4.0
        %v214 = vmul.f32 %v212, %v213
        %v215 = vsub.f32 %v184, %v214
        %v216 = vmul.f32 %v215, %v215
        %v217 = vsel %vm177, %v216, 0.0
        %v218 = vrot.slane %v217, 4
        %v219 = vadd.f32 %v217, %v218
        %v220 = vrot.slane %v219, 2
        %v221 = vadd.f32 %v219, %v220
        %v222 = vrot.slane %v221, 1
        %v223 = vadd.f32 %v221, %v222
        %v224 = vrcp.pop 3.0
        %v225 = vmul.f32 %v223, %v224
        %v226 = vadd.f32 %v225, 1e-05
        %v227 = vrsqrt.pop %v226
        %v228 = vmul.f32 %v215, %v227
        %v229 = vld [vmem:[#allocation5] sm:$0xf]
        %v230 = vadd.f32 %v205, 1e-05
        %v231 = vrsqrt.pop %v230
        %v232 = vmul.f32 %v229, %v231
        %v233 = vmul.f32 %v229, %v228
        %235 = vrot.lane.b32.xlu0 %v229, 1
        %v236 = vpop.permute.xlu0 %235
        %v238 = vmul.f32 %v233, %v236
        %239 = vrot.lane.b32.xlu0 %v229, 127
        %v240 = vpop.permute.xlu0 %239
        %v242 = vadd.f32 %v238, %v240
        %v243 = vmul.f32 %v232, %v184
        %v244 = vsub.f32 %v242, %v243
        %246 = vset.pattern.permute.xlu0 1
        %247 = vperm.xlu0 %246, %v232
        %v248 = vpop.permute.xlu0 %247
        %v250 = vunpack.c.l.s4 839922192
        %v251 = vunpack.c.0.s8 %v250
        %v252 = vlaneseq
        %v253 = vshrl.u32 %v252, 7
        %v254 = vsub.s32 %v251, %v253
        %v255 = vrot.slane %v248, %v254
        %v257 = vmul.f32 %v173, %v255
        %259 = vset.pattern.permute.xlu0 1
        %260 = vperm.xlu0 %259, %v244
        %v261 = vpop.permute.xlu0 %260
        %v263 = vunpack.c.l.s4 839922192
        %v264 = vunpack.c.0.s8 %v263
        %v265 = vlaneseq
        %v266 = vshrl.u32 %v265, 7
        %v267 = vsub.s32 %v264, %v266
        %v268 = vrot.slane %v261, %v267
        %v270 = vadd.f32 %v257, %v268
        %271 = vst [vmem:[%s172] sm:$0xff] %v270
        %s272 = sand.u32 %s75, 1
        %s273 = scalar_lea.sflag [#allocation4], %s272
        %s274 = sand.u32 %s75, 1
        %s275 = smul.addr %s274, 8
        %s276 = scalar_lea.vmem [#allocation7], %s275
        // Predicated region
        $region37: #{tpu_custom_call.1} parent=27 // pred_check
          %p277 = pneg %p85
        $region38: #{tpu_custom_call.1} parent=27 // pred_check_branch
          %279 = sbr.rel (%p277) target = $region40
        $region39: #{tpu_custom_call.1} parent=27 // pred_region
          %s281 = ssub.s32 128, 128
          %282 = vsyncadd %s273, %s281
          %s283 = smul.addr %s20, 2
          %s284 = smul.addr %s283, 64
          %s285 = scalar_lea.hbm %s2, %s284
          %s287 = sshll.u32 %s276, 4
          %s288 = int_to_ptr.vmem [resolvable:$true] %s287
          %290 = dma.vmem_to_hbm [thread:$0]  %s288, 128, %s285, %s273
        $region40: #{tpu_custom_call.1} parent=27 // pred_fallthru
          _
      $region28: #{tpu_custom_call.1} parent=5 // pred_fallthru
        _
      %p291 = scmp.le.s32.totalorder 2, %s15
      // Predicated region
      $region41: #{tpu_custom_call.1} parent=5 // pred_check
        %p292 = pneg %p291
      $region42: #{tpu_custom_call.1} parent=5 // pred_check_branch
        %294 = sbr.rel (%p292) target = $region44
      $region43: #{tpu_custom_call.1} parent=5 // pred_region
        %s295 = ssub.s32 %s15, 2
        // Predicated region
        $region45: #{tpu_custom_call.1} parent=43 // pred_check
          %p296 = pneg %p91
        $region46: #{tpu_custom_call.1} parent=43 // pred_check_branch
          %298 = sbr.rel (%p296) target = $region48
        $region47: #{tpu_custom_call.1} parent=43 // pred_region
          %s299 = sand.u32 %s76, 1
          %s300 = scalar_lea.sflag [#allocation4], %s299
          %s301 = sand.u32 %s76, 1
          %s302 = smul.addr %s301, 8
          %s303 = scalar_lea.vmem [#allocation7], %s302
          %304 = dma.done %s300, 128
        $region48: #{tpu_custom_call.1} parent=43 // pred_fallthru
          _
      $region44: #{tpu_custom_call.1} parent=5 // pred_fallthru
        _
    $region6: #{tpu_custom_call.1} parent=1 // loop_footer
      %s19 = sadd.s32 1, %s15
    $region7: #{tpu_custom_call.1} parent=1 // loop_footer_branch
      %14 = sbr.rel target = $region3
    $region8: #{tpu_custom_call.1} parent=1 // loop_exit
      _
    %305 = vsyncpa [#allocation3], 1
    %s306 = scalar_lea.sflag [#allocation3], 1
    %307 = vsyncpa %s306, 1
    %308 = vsyncpa [#allocation6], 1
    %309 = vsyncpa [#allocation4], 1
    %s310 = scalar_lea.sflag [#allocation4], 1
    %311 = vsyncpa %s310, 1

</llo_original>
